<compile_context>
chip_gen: v6e
topology: v6e:2x2x1
jax: 0.10.0
libtpu: 0.0.40
codegen_flags: <defaults>
</compile_context>

<pallas_src>
import functools

import jax
import jax.numpy as jnp
import numpy as np
from jax.experimental import pallas as pl
from jax.experimental.pallas import tpu as pltpu


# ----------------------------------------------------------------------------
# Kernels
# ----------------------------------------------------------------------------
def _fused_kernel(x_ref, w1_ref, w2_ref, o_ref, *, inv_hw):
    """Single-pass SE block for one batch element.

    x_ref: (C, HW) slab (native dtype), w1_ref: (Cr, C), w2_ref: (C, Cr),
    o_ref: (C, HW).
    """
    x = x_ref[...]
    # Global average pool over the lane (spatial) axis, accumulated in f32.
    z = jnp.sum(x, axis=-1, keepdims=True, dtype=jnp.float32) * inv_hw   # (C, 1)
    # Excitation MLP (two tiny GEMMs) entirely in-kernel (no extra HBM pass).
    h = jnp.dot(w1_ref[...].astype(jnp.float32), z,
                preferred_element_type=jnp.float32)                      # (Cr, 1)
    h = jnp.maximum(h, 0.0)
    g = jax.nn.sigmoid(
        jnp.dot(w2_ref[...].astype(jnp.float32), h,
                preferred_element_type=jnp.float32))                     # (C, 1)
    # Scale and store (gate broadcast over lanes).
    o_ref[...] = (x * g.astype(x.dtype)).astype(o_ref.dtype)


def _pool_partial_kernel(x_ref, psum_ref, *, hw, hw_tile, ragged):
    """Per-(batch, hw-block) partial channel sums.

    x_ref:    (C, hw_tile) tile (native dtype).
    psum_ref: (C, 1) f32 partial sum for this block.
    """
    j = pl.program_id(1)

    if hw_tile % 128 == 0:
        # Fold the lane groups with pure elementwise (VPU) adds; do a single
        # cross-lane (XLU) reduce at the end.
        base = j * hw_tile
        n_fold = hw_tile // 128

        def group(k):
            xs = x_ref[:, k * 128:(k + 1) * 128].astype(jnp.float32)
            if ragged:
                # Mask the padded tail: OOB input lanes are NOT zero-filled.
                lane = jax.lax.broadcasted_iota(jnp.int32, xs.shape, 1)
                xs = jnp.where(base + k * 128 + lane < hw, xs, 0.0)
            return xs

        acc = group(0)
        for k in range(1, n_fold):
            acc = acc + group(k)
        psum_ref[...] = jnp.sum(acc, axis=-1, keepdims=True)
    else:
        # Full-extent block (hw_tile == hw): no padded tail to mask.
        psum_ref[...] = jnp.sum(x_ref[...], axis=-1, keepdims=True,
                                dtype=jnp.float32)


def _scale_kernel(x_ref, g_ref, o_ref):
    """out = x * gate.  Padded tail lanes need no mask (stores are clipped)."""
    o_ref[...] = (x_ref[...] * g_ref[...]).astype(o_ref.dtype)


# ----------------------------------------------------------------------------
# Budgets / tiling
# ----------------------------------------------------------------------------
def _vmem_capacity_bytes():
    try:
        info = pltpu.get_tpu_info()
        cap = int(getattr(info, "vmem_capacity_bytes", 0) or 0)
        if cap > 0:
            return cap
    except Exception:
        pass
    return 64 * 1024 * 1024  # conservative (v7x per-TC VMEM)


def _pick_hw_tile(C, HW, itemsize, max_tile_bytes):
    """Largest multiple-of-128 lane tile within budget; full extent if HW fits."""
    hw_pad = ((HW + 127) // 128) * 128
    per_lane = max(1, C * itemsize)
    max_lanes = max(128, (max_tile_bytes // per_lane) // 128 * 128)
    tile = min(hw_pad, max_lanes)
    if tile >= HW:
        return HW          # full-extent block (always legal, incl. HW % 128 != 0)
    return tile            # multiple of 128; grid uses cdiv + masked tail


# ----------------------------------------------------------------------------
# Wrapper
# ----------------------------------------------------------------------------
def se_block(x_nchw, w1, w2, *, use_fused=None, max_tile_bytes=None,
             donate_x=False):
    """SEBlock forward.  x_nchw: (N, C, H, W); w1: (C//r, C); w2: (C, C//r).

    Matches the PyTorch module with bias=False (the module's default).
    """
    N, C, H, W = x_nchw.shape
    Cr = w1.shape[0]
    HW = H * W
    x = x_nchw.reshape(N, C, HW)
    itemsize = jnp.dtype(x.dtype).itemsize
    w_itemsize = jnp.dtype(w1.dtype).itemsize

    # Generation-aware VMEM budgets.
    vmem_cap = _vmem_capacity_bytes()
    vmem_limit = int(min(vmem_cap * 3 // 5, 64 * 1024 * 1024))   # v7x ~38MiB, v5e/v6e 64MiB
    if max_tile_bytes is None:
        max_tile_bytes = max(512 * 1024, vmem_limit // 12)       # ~3-5 MiB tiles

    io_alias = {0: 0} if donate_x else {}

    # Decide fused vs fallback: double-buffered in+out slabs + weights + slack.
    slab_bytes = C * HW * itemsize
    weights_bytes = 2 * Cr * C * w_itemsize
    fused_budget = vmem_limit - (2 << 20)
    fused_ok = 4 * slab_bytes + 2 * weights_bytes + (256 << 10) <= fused_budget
    if use_fused is None:
        use_fused = fused_ok

    if use_fused:
        # --- Fused single-pass path: x crosses HBM once each way ----------
        out = pl.pallas_call(
            functools.partial(_fused_kernel, inv_hw=float(1.0 / HW)),
            out_shape=jax.ShapeDtypeStruct((N, C, HW), x.dtype),
            grid=(N,),
            in_specs=[
                pl.BlockSpec((None, C, HW), lambda n: (n, 0, 0)),
                pl.BlockSpec((Cr, C), lambda n: (0, 0)),
                pl.BlockSpec((C, Cr), lambda n: (0, 0)),
            ],
            out_specs=pl.BlockSpec((None, C, HW), lambda n: (n, 0, 0)),
            input_output_aliases=io_alias,
            compiler_params=pltpu.CompilerParams(
                dimension_semantics=("parallel",),
                vmem_limit_bytes=vmem_limit),
            cost_estimate=pl.CostEstimate(
                flops=int(2 * N * C * HW + 4 * N * C * Cr),
                transcendentals=int(N * C),
                bytes_accessed=int(2 * N * C * HW * itemsize)),
        )(x, w1, w2)
        return out.reshape(N, C, H, W)

    # --- Fallback 3-stage path (slab does not fit VMEM) --------------------
    hw_tile = _pick_hw_tile(C, HW, itemsize, max_tile_bytes)
    n_hw = pl.cdiv(HW, hw_tile)
    ragged = (HW % hw_tile) != 0

    # Stage 1: per-(n, hw-block) partial channel sums (both axes parallel).
    psum = pl.pallas_call(
        functools.partial(_pool_partial_kernel, hw=HW, hw_tile=hw_tile,
                          ragged=ragged),
        out_shape=jax.ShapeDtypeStruct((N, n_hw, C, 1), jnp.float32),
        grid=(N, n_hw),
        in_specs=[pl.BlockSpec((None, C, hw_tile), lambda n, j: (n, 0, j))],
        out_specs=pl.BlockSpec((None, None, C, 1), lambda n, j: (n, j, 0, 0)),
        compiler_params=pltpu.CompilerParams(
            dimension_semantics=("parallel", "parallel"),
            vmem_limit_bytes=vmem_limit),
        cost_estimate=pl.CostEstimate(
            flops=int(N * C * HW),
            transcendentals=0,
            bytes_accessed=int(N * C * HW * itemsize + N * n_hw * C * 4)),
    )(x)

    # Stage 2: excitation gate, batched over N in plain JAX (tiny GEMMs).
    z = psum[..., 0].sum(axis=1) * jnp.float32(1.0 / HW)           # (N, C)
    h = jax.nn.relu(z @ w1.astype(jnp.float32).T)                  # (N, Cr)
    g = jax.nn.sigmoid(h @ w2.astype(jnp.float32).T)               # (N, C)
    g = g.astype(x.dtype).reshape(N, C, 1)

    # Stage 3: streaming scale with lane-dense stores.
    out = pl.pallas_call(
        _scale_kernel,
        out_shape=jax.ShapeDtypeStruct((N, C, HW), x.dtype),
        grid=(N, n_hw),
        in_specs=[
            pl.BlockSpec((None, C, hw_tile), lambda n, j: (n, 0, j)),
            pl.BlockSpec((None, C, 1), lambda n, j: (n, 0, 0)),
        ],
        out_specs=pl.BlockSpec((None, C, hw_tile), lambda n, j: (n, 0, j)),
        input_output_aliases=io_alias,
        compiler_params=pltpu.CompilerParams(
            dimension_semantics=("parallel", "parallel"),
            vmem_limit_bytes=vmem_limit),
        cost_estimate=pl.CostEstimate(
            flops=int(N * C * HW),
            transcendentals=0,
            bytes_accessed=int(2 * N * C * HW * itemsize + N * C * itemsize)),
    )(x, g)

    return out.reshape(N, C, H, W)


# ----------------------------------------------------------------------------
# Pure-JAX reference (== PyTorch SEBlock forward with bias=False)
# ----------------------------------------------------------------------------
def se_block_reference(x, w1, w2):
    z = jnp.mean(x, axis=(2, 3), keepdims=True)            # adaptive_avg_pool2d(x, 1)
    z = jnp.einsum("rc,nchw->nrhw", w1, z)                  # conv1 (1x1)
    z = jax.nn.relu(z)
    z = jnp.einsum("cr,nrhw->nchw", w2, z)                  # conv2 (1x1)
    z = jax.nn.sigmoid(z)
    return x * z


if __name__ == "__main__":
    # Small but TPU-friendly shapes: C=16 with reduction=8 -> hidden=2,
    # spatial 16x16 -> HW=256 (multiple of 128).
    N, C, H, W = 2, 16, 16, 16
    reduction = 8
    Cr = C // reduction

    key = jax.random.PRNGKey(0)
    kx, k1, k2, kx2 = jax.random.split(key, 4)

    x = jax.random.normal(kx, (N, C, H, W), dtype=jnp.float32)
    # 1x1 conv kernels squeezed to 2-D: conv1 (C//r, C, 1, 1), conv2 (C, C//r, 1, 1).
    w1 = jax.random.normal(k1, (Cr, C), dtype=jnp.float32) * 0.1
    w2 = jax.random.normal(k2, (C, Cr), dtype=jnp.float32) * 0.1

    ref = se_block_reference(x, w1, w2)

    # 1) Fused single-pass path (auto-selected for these shapes).
    out_fused = jax.block_until_ready(se_block(x, w1, w2))
    assert out_fused.shape == (N, C, H, W)
    np.testing.assert_allclose(np.asarray(out_fused), np.asarray(ref),
                               atol=1e-4, rtol=1e-4)

    # 2) Tiled 3-stage fallback path (exact-fit full-extent tile).
    out_tiled = jax.block_until_ready(se_block(x, w1, w2, use_fused=False))
    np.testing.assert_allclose(np.asarray(out_tiled), np.asarray(ref),
                               atol=1e-4, rtol=1e-4)

    # 3) Ragged-HW fallback: HW=400 with forced 128-lane tiles -> cdiv grid
    #    with a masked tail block in the pool and a clipped tail store.
    H2, W2 = 20, 20
    x2 = jax.random.normal(kx2, (1, C, H2, W2), dtype=jnp.float32)
    ref2 = se_block_reference(x2, w1, w2)
    out_ragged = jax.block_until_ready(
        se_block(x2, w1, w2, use_fused=False, max_tile_bytes=8192))
    np.testing.assert_allclose(np.asarray(out_ragged), np.asarray(ref2),
                               atol=1e-4, rtol=1e-4)

    print("KERNEL_OK")
</pallas_src>

<mosaic_0001>
module attributes {stable_mosaic.version = 11 : i64} {
  func.func @_fused_kernel(%arg0: i32, %arg1: memref<1x16x256xf32, #tpu.memory_space<vmem>>, %arg2: memref<2x16xf32, #tpu.memory_space<vmem>>, %arg3: memref<16x2xf32, #tpu.memory_space<vmem>>, %arg4: memref<1x16x256xf32, #tpu.memory_space<vmem>>) attributes {dimension_semantics = [#tpu.dimension_semantics<parallel>], iteration_bounds = array<i64: 2>, scalar_prefetch = 0 : i64, scratch_operands = 0 : i64, tpu.core_type = #tpu.core_type<tc>, window_params = [{transform_indices = @transform_0, window_bounds = array<i64: 1, 16, 256>}, {pipeline_mode = #tpu.pipeline_mode<synchronous>, transform_indices = @transform_1, window_bounds = array<i64: 2, 16>}, {pipeline_mode = #tpu.pipeline_mode<synchronous>, transform_indices = @transform_2, window_bounds = array<i64: 16, 2>}, {transform_indices = @transform_3, window_bounds = array<i64: 1, 16, 256>}]} {
    %c0 = arith.constant 0 : index
    %c0_0 = arith.constant 0 : index
    %c0_1 = arith.constant 0 : index
    %0 = vector.load %arg1[%c0, %c0_0, %c0_1] : memref<1x16x256xf32, #tpu.memory_space<vmem>>, vector<1x16x256xf32>
    %1 = vector.shape_cast %0 : vector<1x16x256xf32> to vector<16x256xf32>
    %cst = arith.constant dense<0.000000e+00> : vector<16xf32>
    %2 = vector.multi_reduction <add>, %1, %cst [1] : vector<16x256xf32> to vector<16xf32>
    %3 = vector.shape_cast %2 : vector<16xf32> to vector<16x1xf32>
    %cst_2 = arith.constant 3.906250e-03 : f32
    %4 = vector.broadcast %cst_2 : f32 to vector<16x1xf32>
    %5 = arith.mulf %3, %4 : vector<16x1xf32>
    %c0_3 = arith.constant 0 : index
    %c0_4 = arith.constant 0 : index
    %6 = vector.load %arg2[%c0_3, %c0_4] : memref<2x16xf32, #tpu.memory_space<vmem>>, vector<2x16xf32>
    %cst_5 = arith.constant dense<0.000000e+00> : vector<2x1xf32>
    %7 = tpu.matmul %6, %5, %cst_5 {dimension_numbers = #tpu.dot_dimension_numbers<[1], [0], [0], [1], [0, 0, 1, 1], [], []>} : vector<2x16xf32>, vector<16x1xf32>, vector<2x1xf32> -> vector<2x1xf32>
    %cst_6 = arith.constant 0.000000e+00 : f32
    %8 = vector.broadcast %cst_6 : f32 to vector<2x1xf32>
    %9 = arith.maximumf %7, %8 : vector<2x1xf32>
    %c0_7 = arith.constant 0 : index
    %c0_8 = arith.constant 0 : index
    %10 = vector.load %arg3[%c0_7, %c0_8] : memref<16x2xf32, #tpu.memory_space<vmem>>, vector<16x2xf32>
    %cst_9 = arith.constant dense<0.000000e+00> : vector<16x1xf32>
    %11 = tpu.matmul %10, %9, %cst_9 {dimension_numbers = #tpu.dot_dimension_numbers<[1], [0], [0], [1], [0, 0, 1, 1], [], []>} : vector<16x2xf32>, vector<2x1xf32>, vector<16x1xf32> -> vector<16x1xf32>
    %12 = arith.negf %11 : vector<16x1xf32>
    %13 = math.exp %12 : vector<16x1xf32>
    %cst_10 = arith.constant 1.000000e+00 : f32
    %14 = vector.broadcast %cst_10 : f32 to vector<16x1xf32>
    %15 = arith.addf %14, %13 : vector<16x1xf32>
    %16 = arith.divf %14, %15 : vector<16x1xf32>
    %17 = vector.broadcast %16 : vector<16x1xf32> to vector<16x256xf32>
    %18 = arith.mulf %1, %17 : vector<16x256xf32>
    %c0_11 = arith.constant 0 : index
    %c0_12 = arith.constant 0 : index
    %c0_13 = arith.constant 0 : index
    %19 = vector.load %arg4[%c0_11, %c0_12, %c0_13] : memref<1x16x256xf32, #tpu.memory_space<vmem>>, vector<1x16x256xf32>
    %20 = vector.shape_cast %19 : vector<1x16x256xf32> to vector<16x256xf32>
    %21 = vector.shape_cast %18 : vector<16x256xf32> to vector<1x16x256xf32>
    tpu.vector_store %arg4[%c0_11, %c0_12, %c0_13], %21 {strides = array<i32>} : memref<1x16x256xf32, #tpu.memory_space<vmem>>, vector<1x16x256xf32>,
    return
  }
  func.func @transform_0(%arg0: i32) -> (i32, i32, i32) {
    %c0_i32 = arith.constant 0 : i32
    %c0_i32_0 = arith.constant 0 : i32
    %c0_i32_1 = arith.constant 0 : i32
    return %arg0, %c0_i32, %c0_i32_0 : i32, i32, i32
  }
  func.func @transform_1(%arg0: i32) -> (i32, i32) {
    %c0_i32 = arith.constant 0 : i32
    %c0_i32_0 = arith.constant 0 : i32
    %c0_i32_1 = arith.constant 0 : i32
    return %c0_i32, %c0_i32_0 : i32, i32
  }
  func.func @transform_2(%arg0: i32) -> (i32, i32) {
    %c0_i32 = arith.constant 0 : i32
    %c0_i32_0 = arith.constant 0 : i32
    %c0_i32_1 = arith.constant 0 : i32
    return %c0_i32, %c0_i32_0 : i32, i32
  }
  func.func @transform_3(%arg0: i32) -> (i32, i32, i32) {
    %c0_i32 = arith.constant 0 : i32
    %c0_i32_0 = arith.constant 0 : i32
    %c0_i32_1 = arith.constant 0 : i32
    return %arg0, %c0_i32, %c0_i32_0 : i32, i32, i32
  }
}

</mosaic_0001>

<llo_original>
// kernel: tpu_custom_call.1
$region0: #{tpu_custom_call.1}
  #allocation0 [shape = 'u32[]', space=smem, size = 0x4, offset = 0x4, fixed_abs, tag = 'smem constant byte address 0x4 - core index']
  #allocation1 [shape = 'u32[144,128]{1,0:T(1,128)}', space=vmem, size = 0x12000, scoped, tag = 'internal scratch']
  %s0 = inlined_call_operand.hbm [shape: f32[2,16,256], index: 0, kind: input, shape index: {}]
  %s1 = inlined_call_operand.vmem [shape: f32[2,16], index: 1, kind: input, shape index: {}]
  %s2 = inlined_call_operand.vmem [shape: f32[16,2], index: 2, kind: input, shape index: {}]
  %s3 = inlined_call_operand.hbm [shape: f32[2,16,256], index: 3, kind: output, shape index: {}]
  %s4 = sld [smem:[#allocation0]]
  $region49: #{tpu_custom_call.1} parent=0
    _
  %s6 = ssub.s32 1, %s4
  %s7 = scalar_select 0, %s6, %s4
  $region1: #{tpu_custom_call.1} parent=0
    #allocation2 [shape = 'u8[32768]{0}', space=vmem, size = 0x8000, scoped, tag = 'input window, operand 0']
    #allocation3 [shape = 's32[2]{0}', space=sflag, size = 0x8, scoped, tag = 'scoped memory for tpu_custom_call.1']
    #allocation4 [shape = 's32[2]{0}', space=sflag, size = 0x8, scoped, tag = 'scoped memory for tpu_custom_call.1']
    #allocation5 [shape = 'u8[32768]{0}', space=vmem, size = 0x8000, scoped, tag = 'output window, operand 0']
    %8 = vsyncpa [#allocation3], 0
    %s9 = scalar_lea.sflag [#allocation3], 1
    %10 = vsyncpa %s9, 0
    %11 = vsyncpa [#allocation4], 0
    %s12 = scalar_lea.sflag [#allocation4], 1
    %13 = vsyncpa %s12, 0
    loop: start=0, step=1, limit=4
    $region2: #{tpu_custom_call.1} parent=1 // loop_pre_header
      _
    $region3: #{tpu_custom_call.1} parent=1 // loop_header
      %s15 = sphi 0, %s19
      %p16 = scmp.ge.s32.totalorder %s15, 4
      %s25 = sphi 0, %s27
      %s28 = sphi 0, %s25
      %s29 = sphi 0, %s28
      %s45 = sphi 0, %s29
      %s49 = sphi 0, %s49
      %s51 = sphi 0, %s49
      %s52 = sphi 0, %s51
      %s66 = sphi 0, %s52
      %s70 = sphi 0, %s70
      %s72 = sphi 0, %s70
      %s73 = sphi 0, %s72
      %s87 = sphi 0, %s73
      %s93 = sphi 0, %s95
      %s96 = sphi 0, %s93
      %s97 = sphi 0, %s96
      %s113 = sphi 0, %s97
    $region4: #{tpu_custom_call.1} parent=1 // loop_header_branch
      %18 = sbr.rel (%p16) target = $region8
    $region5: #{tpu_custom_call.1} parent=1 // loop_body
      %s20 = ssub.s32 %s15, 1
      %s21 = ssub.s32 %s15, 2
      %s22 = sadd.s32 %s15, 1
      %s23 = ssub.s32 %s15, %s22
      %p24 = scmp.eq.s32.totalorder %s23, 0
      %s26 = sadd.s32 %s25, 1
      %s27 = scalar_select %p24, %s25, %s26
      %p30 = pneg %p24
      %p31 = scmp.eq.s32.totalorder %s15, 1
      %p32 = por %p30, %p31
      %p33 = scmp.ne.s32.totalorder %s25, %s28
      %p34 = scmp.eq.s32.totalorder %s15, 0
      %p35 = por %p33, %p34
      %p36 = scmp.ne.s32.totalorder %s25, %s28
      %p37 = scmp.eq.s32.totalorder %s20, 1
      %p38 = por %p36, %p37
      %p39 = scmp.ne.s32.totalorder %s28, %s29
      %p40 = scmp.eq.s32.totalorder %s20, 0
      %p41 = por %p39, %p40
      %p42 = scmp.ne.s32.totalorder %s28, %s29
      %p43 = scmp.eq.s32.totalorder %s21, 1
      %p44 = por %p42, %p43
      %p46 = scmp.ne.s32.totalorder %s29, %s45
      %p47 = scmp.eq.s32.totalorder %s21, 0
      %p48 = por %p46, %p47
      %s50 = sadd.s32 %s49, 1
      %p53 = scmp.eq.s32.totalorder %s15, 1
      %p54 = scmp.ne.s32.totalorder %s49, %s51
      %p55 = scmp.eq.s32.totalorder %s15, 0
      %p56 = por %p54, %p55
      %p57 = scmp.ne.s32.totalorder %s49, %s51
      %p58 = scmp.eq.s32.totalorder %s20, 1
      %p59 = por %p57, %p58
      %p60 = scmp.ne.s32.totalorder %s51, %s52
      %p61 = scmp.eq.s32.totalorder %s20, 0
      %p62 = por %p60, %p61
      %p63 = scmp.ne.s32.totalorder %s51, %s52
      %p64 = scmp.eq.s32.totalorder %s21, 1
      %p65 = por %p63, %p64
      %p67 = scmp.ne.s32.totalorder %s52, %s66
      %p68 = scmp.eq.s32.totalorder %s21, 0
      %p69 = por %p67, %p68
      %s71 = sadd.s32 %s70, 1
      %p74 = scmp.eq.s32.totalorder %s15, 1
      %p75 = scmp.ne.s32.totalorder %s70, %s72
      %p76 = scmp.eq.s32.totalorder %s15, 0
      %p77 = por %p75, %p76
      %p78 = scmp.ne.s32.totalorder %s70, %s72
      %p79 = scmp.eq.s32.totalorder %s20, 1
      %p80 = por %p78, %p79
      %p81 = scmp.ne.s32.totalorder %s72, %s73
      %p82 = scmp.eq.s32.totalorder %s20, 0
      %p83 = por %p81, %p82
      %p84 = scmp.ne.s32.totalorder %s72, %s73
      %p85 = scmp.eq.s32.totalorder %s21, 1
      %p86 = por %p84, %p85
      %p88 = scmp.ne.s32.totalorder %s73, %s87
      %p89 = scmp.eq.s32.totalorder %s21, 0
      %p90 = por %p88, %p89
      %s91 = ssub.s32 %s15, %s22
      %p92 = scmp.eq.s32.totalorder %s91, 0
      %s94 = sadd.s32 %s93, 1
      %s95 = scalar_select %p92, %s93, %s94
      %p98 = pneg %p92
      %p99 = scmp.eq.s32.totalorder %s15, 1
      %p100 = por %p98, %p99
      %p101 = scmp.ne.s32.totalorder %s93, %s96
      %p102 = scmp.eq.s32.totalorder %s15, 0
      %p103 = por %p101, %p102
      %p104 = scmp.ne.s32.totalorder %s93, %s96
      %p105 = scmp.eq.s32.totalorder %s20, 1
      %p106 = por %p104, %p105
      %p107 = scmp.ne.s32.totalorder %s96, %s97
      %p108 = scmp.eq.s32.totalorder %s20, 0
      %p109 = por %p107, %p108
      %p110 = scmp.ne.s32.totalorder %s96, %s97
      %p111 = scmp.eq.s32.totalorder %s21, 1
      %p112 = por %p110, %p111
      %p114 = scmp.ne.s32.totalorder %s97, %s113
      %p115 = scmp.eq.s32.totalorder %s21, 0
      %p116 = por %p114, %p115
      %p117 = scmp.le.s32.totalorder 1, %s15
      %p118 = scmp.lt.s32.totalorder %s15, 3
      %p119 = pnand %p117, %p118
      %p120 = pneg %p119
      // Predicated region
      $region9: #{tpu_custom_call.1} parent=5 // pred_check
        _
      $region10: #{tpu_custom_call.1} parent=5 // pred_check_branch
        %122 = sbr.rel (%p119) target = $region12
      $region11: #{tpu_custom_call.1} parent=5 // pred_region
        %s123 = ssub.s32 %s15, 1
        // Predicated region
        $region13: #{tpu_custom_call.1} parent=11 // pred_check
          %p124 = pneg %p62
        $region14: #{tpu_custom_call.1} parent=11 // pred_check_branch
          %126 = sbr.rel (%p124) target = $region16
        $region15: #{tpu_custom_call.1} parent=11 // pred_region
          _
        $region16: #{tpu_custom_call.1} parent=11 // pred_fallthru
          _
        // Predicated region
        $region17: #{tpu_custom_call.1} parent=11 // pred_check
          %p127 = pneg %p83
        $region18: #{tpu_custom_call.1} parent=11 // pred_check_branch
          %129 = sbr.rel (%p127) target = $region20
        $region19: #{tpu_custom_call.1} parent=11 // pred_region
          _
        $region20: #{tpu_custom_call.1} parent=11 // pred_fallthru
          _
      $region12: #{tpu_custom_call.1} parent=5 // pred_fallthru
        _
      %p130 = scmp.lt.s32.totalorder %s15, 2
      // Predicated region
      $region21: #{tpu_custom_call.1} parent=5 // pred_check
        %p131 = pneg %p130
      $region22: #{tpu_custom_call.1} parent=5 // pred_check_branch
        %133 = sbr.rel (%p131) target = $region24
      $region23: #{tpu_custom_call.1} parent=5 // pred_region
        // Predicated region
        $region25: #{tpu_custom_call.1} parent=23 // pred_check
          %p134 = pneg %p35
        $region26: #{tpu_custom_call.1} parent=23 // pred_check_branch
          %136 = sbr.rel (%p134) target = $region28
        $region27: #{tpu_custom_call.1} parent=23 // pred_region
          %s137 = sand.u32 %s25, 1
          %s138 = scalar_lea.sflag [#allocation3], %s137
          %s139 = sand.u32 %s25, 1
          %s140 = smul.addr %s139, 32
          %s141 = scalar_lea.vmem [#allocation2], %s140
          %s143 = ssub.s32 512, 512
          %144 = vsyncadd %s138, %s143
          %s145 = smul.addr %s15, 4
          %s146 = smul.addr %s145, 128
          %s147 = scalar_lea.hbm %s0, %s146
          %s148 = sshll.u32 %s141, 4
          %s149 = int_to_ptr.vmem [resolvable:$true] %s148
          %154 = dma.hbm_to_vmem [thread:$0]  %s147, 512, %s149, %s138, 256, 256, 16
        $region28: #{tpu_custom_call.1} parent=23 // pred_fallthru
          _
      $region24: #{tpu_custom_call.1} parent=5 // pred_fallthru
        _
      %p155 = scmp.le.s32.totalorder 1, %s15
      %p156 = scmp.lt.s32.totalorder %s15, 3
      %p157 = pnand %p155, %p156
      %p158 = pneg %p157
      // Predicated region
      $region29: #{tpu_custom_call.1} parent=5 // pred_check
        _
      $region30: #{tpu_custom_call.1} parent=5 // pred_check_branch
        %160 = sbr.rel (%p157) target = $region32
      $region31: #{tpu_custom_call.1} parent=5 // pred_region
        %s161 = ssub.s32 %s15, 1
        %s162 = sand.u32 %s28, 1
        %s163 = scalar_lea.sflag [#allocation3], %s162
        %s164 = sand.u32 %s28, 1
        %s165 = smul.addr %s164, 32
        %s166 = scalar_lea.vmem [#allocation2], %s165
        // Predicated region
        $region33: #{tpu_custom_call.1} parent=31 // pred_check
          %p167 = pneg %p41
        $region34: #{tpu_custom_call.1} parent=31 // pred_check_branch
          %169 = sbr.rel (%p167) target = $region36
        $region35: #{tpu_custom_call.1} parent=31 // pred_region
          %170 = dma.done %s163, 512
        $region36: #{tpu_custom_call.1} parent=31 // pred_fallthru
          _
        %s171 = sand.u32 %s28, 1
        %s172 = scalar_lea.sflag [#allocation3], %s171
        %s173 = sand.u32 %s28, 1
        %s174 = smul.addr %s173, 32
        %s175 = scalar_lea.vmem [#allocation2], %s174
        %p176 = pneg %p41
        %p177 = pneg %p38
        %p178 = pneg %p62
        %p179 = pneg %p59
        %p180 = pneg %p83
        %p181 = pneg %p80
        %p182 = pneg %p109
        %p183 = pneg %p106
        %s184 = sand.u32 %s96, 1
        %s185 = scalar_lea.sflag [#allocation4], %s184
        %s186 = sand.u32 %s96, 1
        %s187 = smul.addr %s186, 32
        %s188 = scalar_lea.vmem [#allocation5], %s187
        %v189 = vld [vmem:[%s166] sm:$0xff]
        %v190 = vld [vmem:[%s166 + $0x8] sm:$0xff]
        %v191 = vld [vmem:[%s166 + $0x10] sm:$0xff]
        %v192 = vld [vmem:[%s166 + $0x18] sm:$0xff]
        %v193 = vadd.f32 %v189, %v190
        %194 = vadd.xlane.f32.xlu0 %v193
        %v195 = vpop.xlane.xlu0 %194
        %v196 = vadd.f32 %v191, %v192
        %197 = vadd.xlane.f32.xlu0 %v196
        %v198 = vpop.xlane.xlu0 %197
        %v199 = vmul.f32 %v195, 0.00390625
        %v200 = vmul.f32 %v198, 0.00390625
        %v201 = vld [vmem:[%s1] sm:$0x3]
        %vm202 = vcmask 130048
        %v204 = vsel %vm202, %v201, 0
        %206 = vmatprep.subr.mxu0 0.0
        %207 = vmatpush1.msra.mxu0 0.0
        %208 = vmatprep.subr.mxu0 0.0
        %209 = vmatpush1.msra.mxu0 0.0
        %210 = vmatprep.subr.mxu0 0.0
        %211 = vmatpush1.msra.mxu0 0.0
        %212 = vmatprep.subr.mxu0 0.0
        %213 = vmatpush1.msra.mxu0 0.0
        %214 = vmatprep.subr.mxu0 0.0
        %215 = vmatpush1.msra.mxu0 0.0
        %216 = vmatprep.subr.mxu0 0.0
        %217 = vmatpush1.msra.mxu0 0.0
        %218 = vmatprep.subr.mxu0 0.0
        %219 = vmatpush1.msra.mxu0 0.0
        %220 = vmatprep.subr.mxu0 0.0
        %221 = vmatpush1.msra.mxu0 0.0
        %222 = vmatprep.subr.mxu0 0.0
        %223 = vmatpush1.msra.mxu0 0.0
        %224 = vmatprep.subr.mxu0 0.0
        %225 = vmatpush1.msra.mxu0 0.0
        %226 = vmatprep.subr.mxu0 0.0
        %227 = vmatpush1.msra.mxu0 0.0
        %228 = vmatprep.subr.mxu0 0.0
        %229 = vmatpush1.msra.mxu0 0.0
        %230 = vmatprep.subr.mxu0 0.0
        %231 = vmatpush1.msra.mxu0 0.0
        %232 = vmatprep.subr.mxu0 0.0
        %233 = vmatpush1.msra.mxu0 0.0
        %234 = vmatprep.subr.mxu0 0.0
        %235 = vmatpush1.msra.mxu0 %v200
        %236 = vmatprep.subr.mxu0 0.0
        %237 = vmatpush1.msra.mxu0 %v199
        %238 = vmatprep.subr.mxu0 0.0
        %239 = vmatpush2.msra.mxu0 0.0
        %240 = vmatprep.subr.mxu0 0.0
        %241 = vmatpush2.msra.mxu0 0.0
        %242 = vmatprep.subr.mxu0 0.0
        %243 = vmatpush2.msra.mxu0 0.0
        %244 = vmatprep.subr.mxu0 0.0
        %245 = vmatpush2.msra.mxu0 0.0
        %246 = vmatprep.subr.mxu0 0.0
        %247 = vmatpush2.msra.mxu0 0.0
        %248 = vmatprep.subr.mxu0 0.0
        %249 = vmatpush2.msra.mxu0 0.0
        %250 = vmatprep.subr.mxu0 0.0
        %251 = vmatpush2.msra.mxu0 0.0
        %252 = vmatprep.subr.mxu0 0.0
        %253 = vmatpush2.msra.mxu0 0.0
        %254 = vmatprep.subr.mxu0 0.0
        %255 = vmatpush2.msra.mxu0 0.0
        %256 = vmatprep.subr.mxu0 0.0
        %257 = vmatpush2.msra.mxu0 0.0
        %258 = vmatprep.subr.mxu0 0.0
        %259 = vmatpush2.msra.mxu0 0.0
        %260 = vmatprep.subr.mxu0 0.0
        %261 = vmatpush2.msra.mxu0 0.0
        %262 = vmatprep.subr.mxu0 0.0
        %263 = vmatpush2.msra.mxu0 0.0
        %264 = vmatprep.subr.mxu0 0.0
        %265 = vmatpush2.msra.mxu0 0.0
        %266 = vmatprep.subr.mxu0 0.0
        %267 = vmatpush2.msra.mxu0 0.0
        %268 = vmatprep.subr.mxu0 0.0
        %269 = vmatpush2.msra.mxu0 0.0
        %270 = vmatprep.mubr.f32.mxu0 0.0
        %271 = vmatmul.mubr.f32.gmra.mxu0 %v204
        %v272 = vpop.f32.mrf.mxu0
        %v273 = vadd.f32 0.0, %v272
        %v274 = vpop.f32.mrf.mxu0
        %275 = vdwg.mxu0
        %v276 = vmax.f32 %v273, 0.0
        %v277 = vld [vmem:[%s2] sm:$0xff]
        %v278 = vld [vmem:[%s2 + $0x8] sm:$0xff]
        %vm279 = vcmask 15360
        %v281 = vsel %vm279, %v277, 0
        %v284 = vsel %vm279, %v278, 0
        %vm286 = vcmask 1041408
        %v288 = vsel %vm286, %v276, 0
        %290 = vmatprep.subr.mxu0 0.0
        %291 = vmatpush1.msra.mxu0 0.0
        %292 = vmatprep.subr.mxu0 0.0
        %293 = vmatpush1.msra.mxu0 0.0
        %294 = vmatprep.subr.mxu0 0.0
        %295 = vmatpush1.msra.mxu0 0.0
        %296 = vmatprep.subr.mxu0 0.0
        %297 = vmatpush1.msra.mxu0 0.0
        %298 = vmatprep.subr.mxu0 0.0
        %299 = vmatpush1.msra.mxu0 0.0
        %300 = vmatprep.subr.mxu0 0.0
        %301 = vmatpush1.msra.mxu0 0.0
        %302 = vmatprep.subr.mxu0 0.0
        %303 = vmatpush1.msra.mxu0 0.0
        %304 = vmatprep.subr.mxu0 0.0
        %305 = vmatpush1.msra.mxu0 0.0
        %306 = vmatprep.subr.mxu0 0.0
        %307 = vmatpush1.msra.mxu0 0.0
        %308 = vmatprep.subr.mxu0 0.0
        %309 = vmatpush1.msra.mxu0 0.0
        %310 = vmatprep.subr.mxu0 0.0
        %311 = vmatpush1.msra.mxu0 0.0
        %312 = vmatprep.subr.mxu0 0.0
        %313 = vmatpush1.msra.mxu0 0.0
        %314 = vmatprep.subr.mxu0 0.0
        %315 = vmatpush1.msra.mxu0 0.0
        %316 = vmatprep.subr.mxu0 0.0
        %317 = vmatpush1.msra.mxu0 0.0
        %318 = vmatprep.subr.mxu0 0.0
        %319 = vmatpush1.msra.mxu0 0.0
        %320 = vmatprep.subr.mxu0 0.0
        %321 = vmatpush1.msra.mxu0 %v288
        %322 = vmatprep.subr.mxu0 0.0
        %323 = vmatpush2.msra.mxu0 0.0
        %324 = vmatprep.subr.mxu0 0.0
        %325 = vmatpush2.msra.mxu0 0.0
        %326 = vmatprep.subr.mxu0 0.0
        %327 = vmatpush2.msra.mxu0 0.0
        %328 = vmatprep.subr.mxu0 0.0
        %329 = vmatpush2.msra.mxu0 0.0
        %330 = vmatprep.subr.mxu0 0.0
        %331 = vmatpush2.msra.mxu0 0.0
        %332 = vmatprep.subr.mxu0 0.0
        %333 = vmatpush2.msra.mxu0 0.0
        %334 = vmatprep.subr.mxu0 0.0
        %335 = vmatpush2.msra.mxu0 0.0
        %336 = vmatprep.subr.mxu0 0.0
        %337 = vmatpush2.msra.mxu0 0.0
        %338 = vmatprep.subr.mxu0 0.0
        %339 = vmatpush2.msra.mxu0 0.0
        %340 = vmatprep.subr.mxu0 0.0
        %341 = vmatpush2.msra.mxu0 0.0
        %342 = vmatprep.subr.mxu0 0.0
        %343 = vmatpush2.msra.mxu0 0.0
        %344 = vmatprep.subr.mxu0 0.0
        %345 = vmatpush2.msra.mxu0 0.0
        %346 = vmatprep.subr.mxu0 0.0
        %347 = vmatpush2.msra.mxu0 0.0
        %348 = vmatprep.subr.mxu0 0.0
        %349 = vmatpush2.msra.mxu0 0.0
        %350 = vmatprep.subr.mxu0 0.0
        %351 = vmatpush2.msra.mxu0 0.0
        %352 = vmatprep.subr.mxu0 0.0
        %353 = vmatpush2.msra.mxu0 0.0
        %354 = vmatprep.mubr.f32.mxu0 0.0
        %355 = vmatmul.mubr.f32.gmra.mxu0 %v281
        %v356 = vpop.f32.mrf.mxu0
        %v357 = vadd.f32 0.0, %v356
        %v358 = vpop.f32.mrf.mxu0
        %359 = vmatprep.mubr.f32.mxu0 0.0
        %360 = vmatmul.mubr.f32.gmra.mxu0 %v284
        %v361 = vpop.f32.mrf.mxu0
        %v362 = vadd.f32 0.0, %v361
        %v363 = vpop.f32.mrf.mxu0
        %364 = vdwg.mxu0
        %v365 = vxor.u32 %v357, 2147483648
        %v366 = vxor.u32 %v362, 2147483648
        %v367 = vmul.f32 %v365, 1.442695
        %v368 = vpow.pop %v367
        %v369 = vmul.f32 %v366, 1.442695
        %v370 = vpow.pop %v369
        %v371 = vadd.f32 %v368, 1.0
        %v372 = vadd.f32 %v370, 1.0
        %v373 = vrcp.pop %v371
        %v374 = vmul.f32 1.0, %v373
        %v375 = vrcp.pop %v372
        %v376 = vmul.f32 1.0, %v375
        %378 = vset.pattern.permute.xlu0 0
        %379 = vperm.xlu0 %378, %v374
        %v380 = vpop.permute.xlu0 %379
        %383 = vset.pattern.permute.xlu0 0
        %384 = vperm.xlu0 %383, %v376
        %v385 = vpop.permute.xlu0 %384
        %v387 = vmul.f32 %v189, %v380
        %v388 = vmul.f32 %v190, %v380
        %v389 = vmul.f32 %v191, %v385
        %v390 = vmul.f32 %v192, %v385
        %391 = vst [vmem:[%s188] sm:$0xff] %v387
        %392 = vst [vmem:[%s188 + $0x8] sm:$0xff] %v388
        %393 = vst [vmem:[%s188 + $0x10] sm:$0xff] %v389
        %394 = vst [vmem:[%s188 + $0x18] sm:$0xff] %v390
        %s395 = sand.u32 %s96, 1
        %s396 = scalar_lea.sflag [#allocation4], %s395
        %s397 = sand.u32 %s96, 1
        %s398 = smul.addr %s397, 32
        %s399 = scalar_lea.vmem [#allocation5], %s398
        // Predicated region
        $region37: #{tpu_custom_call.1} parent=31 // pred_check
          %p400 = pneg %p106
        $region38: #{tpu_custom_call.1} parent=31 // pred_check_branch
          %402 = sbr.rel (%p400) target = $region40
        $region39: #{tpu_custom_call.1} parent=31 // pred_region
          %s404 = ssub.s32 512, 512
          %405 = vsyncadd %s396, %s404
          %s406 = smul.addr %s20, 4
          %s407 = smul.addr %s406, 128
          %s408 = scalar_lea.hbm %s3, %s407
          %s409 = sshll.u32 %s399, 4
          %s410 = int_to_ptr.vmem [resolvable:$true] %s409
          %415 = dma.vmem_to_hbm [thread:$0]  %s410, 512, %s408, %s396, 256, 256, 16
        $region40: #{tpu_custom_call.1} parent=31 // pred_fallthru
          _
      $region32: #{tpu_custom_call.1} parent=5 // pred_fallthru
        _
      %p416 = scmp.le.s32.totalorder 2, %s15
      // Predicated region
      $region41: #{tpu_custom_call.1} parent=5 // pred_check
        %p417 = pneg %p416
      $region42: #{tpu_custom_call.1} parent=5 // pred_check_branch
        %419 = sbr.rel (%p417) target = $region44
      $region43: #{tpu_custom_call.1} parent=5 // pred_region
        %s420 = ssub.s32 %s15, 2
        // Predicated region
        $region45: #{tpu_custom_call.1} parent=43 // pred_check
          %p421 = pneg %p112
        $region46: #{tpu_custom_call.1} parent=43 // pred_check_branch
          %423 = sbr.rel (%p421) target = $region48
        $region47: #{tpu_custom_call.1} parent=43 // pred_region
          %s424 = sand.u32 %s97, 1
          %s425 = scalar_lea.sflag [#allocation4], %s424
          %s426 = sand.u32 %s97, 1
          %s427 = smul.addr %s426, 32
          %s428 = scalar_lea.vmem [#allocation5], %s427
          %429 = dma.done %s425, 512
        $region48: #{tpu_custom_call.1} parent=43 // pred_fallthru
          _
      $region44: #{tpu_custom_call.1} parent=5 // pred_fallthru
        _
    $region6: #{tpu_custom_call.1} parent=1 // loop_footer
      %s19 = sadd.s32 1, %s15
    $region7: #{tpu_custom_call.1} parent=1 // loop_footer_branch
      %14 = sbr.rel target = $region3
    $region8: #{tpu_custom_call.1} parent=1 // loop_exit
      _
    %430 = vsyncpa [#allocation3], 1
    %s431 = scalar_lea.sflag [#allocation3], 1
    %432 = vsyncpa %s431, 1
    %433 = vsyncpa [#allocation4], 1
    %s434 = scalar_lea.sflag [#allocation4], 1
    %435 = vsyncpa %s434, 1

</llo_original>
